<compile_context>
chip_gen: v7x
topology: tpu7x:2x2x1
jax: 0.10.0
libtpu: 0.0.40
codegen_flags: <defaults>
</compile_context>

<pallas_src>
import functools

import jax
import jax.numpy as jnp
from jax.experimental import pallas as pl
from jax.experimental.pallas import tpu as pltpu

BN_EPS = 1e-5
LANE = 128
NEG_BIG = -1e30
_VMEM_HEADROOM = 12 * 1024 * 1024  # bytes left free below physical VMEM


def _round_up(n, m):
    return ((n + m - 1) // m) * m


def _round_down16(n):
    return max(16, (n // 16) * 16)


def _elu(x):
    # nn.ELU(alpha=1.0); exp computed on a clamped value so the discarded
    # branch never produces inf (safe if this ever gets differentiated).
    return jnp.where(x > 0, x, jnp.exp(jnp.minimum(x, 0.0)) - 1.0)


def _vmem_capacity_bytes():
    try:
        info = pltpu.get_tpu_info()
        cap = getattr(info, "vmem_capacity_bytes", None)
        if cap:
            return int(cap)
    except Exception:
        pass
    return 64 * 1024 * 1024  # conservative (v7x per-core VMEM)


# ----------------------------------------------------------------------------
# Kernel: Linear(+folded BN) -> ELU -> Linear(+folded BN) -> ELU -> Linear
#         -> softmax (pred, bf16) + per-row sum_j(y * logp) for the KL loss.
# ----------------------------------------------------------------------------
def spada_fwd_kernel(
    x_ref, y_ref,
    w1_ref, b1_ref,
    w2_ref, b2_ref,
    w3_ref, b3_ref,
    pred_ref, ce_ref,
    *, n_classes,
):
    # --- Feature extractor, layer 1 (BN folded into Linear) ---
    x = x_ref[...].astype(jnp.bfloat16)          # no-op cast if x already bf16
    h = jnp.dot(x, w1_ref[...], preferred_element_type=jnp.float32)
    h = _elu(h + b1_ref[...])

    # --- Feature extractor, layer 2 (BN folded into Linear) ---
    z = jnp.dot(h.astype(jnp.bfloat16), w2_ref[...],
                preferred_element_type=jnp.float32)
    z = _elu(z + b2_ref[...])

    # --- Source classifier: Linear -> softmax (single exp, EUP reciprocal) ---
    logits = jnp.dot(z.astype(jnp.bfloat16), w3_ref[...],
                     preferred_element_type=jnp.float32) + b3_ref[...]
    s = logits - jnp.max(logits, axis=1, keepdims=True)
    e = jnp.exp(s)
    sum_e = jnp.sum(e, axis=1, keepdims=True)
    pred_ref[...] = (e * pl.reciprocal(sum_e, approx=True)).astype(pred_ref.dtype)

    # --- per-row sum_j y*logp (entropy term sum_j y*log y added on host) ---
    logp = s - jnp.log(sum_e)
    ce_ref[...] = jnp.sum(y_ref[...] * logp[:, :n_classes], axis=1, keepdims=True)


# ----------------------------------------------------------------------------
# Host-side parameter prep: fold eval-mode BN into Linears, pad lanes, cast
# MXU inputs to bf16.
# ----------------------------------------------------------------------------
def _pad2(a, shape, col_value=0.0):
    r, c = a.shape
    rp, cp = shape
    if cp > c:
        a = jnp.pad(a, ((0, 0), (0, cp - c)), constant_values=col_value)
    if rp > r:
        a = jnp.pad(a, ((0, rp - r), (0, 0)), constant_values=0.0)
    return a


def prepare_params(params, eps=BN_EPS):
    def fold(w, b, g, be, m, v):
        s = g * jax.lax.rsqrt(v + eps)            # (1, n)
        return w * s, (b - m) * s + be

    w1, b1 = fold(params["w1"], params["b1"], params["g1"], params["be1"],
                  params["m1"], params["v1"])
    w2, b2 = fold(params["w2"], params["b2"], params["g2"], params["be2"],
                  params["m2"], params["v2"])
    w3, b3 = params["w3"], params["b3"]

    d_in = w1.shape[0]
    d_h1p = _round_up(w1.shape[1], LANE)
    d_fp = _round_up(w2.shape[1], LANE)
    d_op = _round_up(w3.shape[1], LANE)

    w1 = _pad2(w1, (d_in, d_h1p))
    b1 = _pad2(b1, (1, d_h1p))
    w2 = _pad2(w2, (d_h1p, d_fp))
    b2 = _pad2(b2, (1, d_fp))
    w3 = _pad2(w3, (d_fp, d_op))
    # padded class columns get a huge negative bias -> softmax prob exactly 0
    b3 = _pad2(b3, (1, d_op), col_value=NEG_BIG)

    return dict(
        w1=w1.astype(jnp.bfloat16), b1=b1.astype(jnp.float32),
        w2=w2.astype(jnp.bfloat16), b2=b2.astype(jnp.float32),
        w3=w3.astype(jnp.bfloat16), b3=b3.astype(jnp.float32),
    )


# ----------------------------------------------------------------------------
# Wrapper: batch-gridded pallas_call ('inf' pred + 'eval' KL loss).
# ----------------------------------------------------------------------------
def spada_forward(x, y, fused, *, d_out, tb=1024):
    B, d_in = x.shape
    d_h1p = fused["w1"].shape[1]
    d_fp = fused["w2"].shape[1]
    d_outp = fused["w3"].shape[1]
    assert y.shape == (B, d_out)
    y = y.astype(jnp.float32)

    # --- VMEM / tile budgeting (generation-aware) -----------------------------
    cap = _vmem_capacity_bytes()
    weight_bytes = (
        2 * (fused["w1"].size + fused["w2"].size + fused["w3"].size)
        + 4 * (fused["b1"].size + fused["b2"].size + fused["b3"].size))
    row_io = d_in * x.dtype.itemsize + d_out * 4 + d_outp * 2 + 4   # x + y + pred(bf16) + ce
    row_interm = 4 * (d_h1p + d_fp + 4 * d_outp)                    # f32 h, z, softmax temps

    if B < 16:
        tb = B                                   # full-dim block, single grid step
    else:
        tb = min(tb, _round_down16(B))
        budget = cap - _VMEM_HEADROOM - weight_bytes   # weights single-buffered
        while tb > 16 and 2 * tb * row_io + tb * row_interm > budget:
            tb = _round_down16(tb // 2)
        # v7x: keep >=2 grid blocks so both TensorCores get work (no-op on v5e/v6e)
        while tb > 16 and pl.cdiv(B, tb) < 2:
            tb = _round_down16(tb // 2)

    num_blocks = pl.cdiv(B, tb)
    vmem_est = 2 * weight_bytes + 2 * tb * row_io + tb * row_interm + (6 << 20)
    vmem_limit = int(max(32 << 20, min(vmem_est, cap - _VMEM_HEADROOM)))

    kernel = functools.partial(spada_fwd_kernel, n_classes=d_out)
    out_shape = (
        jax.ShapeDtypeStruct((B, d_outp), jnp.bfloat16),   # pred (bf16 writeback)
        jax.ShapeDtypeStruct((B, 1), jnp.float32),         # per-row sum_j y*logp
    )

    def build(weight_pipeline_mode):
        wkw = {} if weight_pipeline_mode is None else {
            "pipeline_mode": weight_pipeline_mode}

        def wspec(shape):
            return pl.BlockSpec(shape, lambda i: (0, 0), **wkw)

        grid_spec = pltpu.PrefetchScalarGridSpec(
            num_scalar_prefetch=0,
            grid=(num_blocks,),
            in_specs=[
                pl.BlockSpec((tb, d_in), lambda i: (i, 0)),     # x tile (pipelined)
                pl.BlockSpec((tb, d_out), lambda i: (i, 0)),    # y tile, natural width
                wspec((d_in, d_h1p)),                           # resident weights
                wspec((1, d_h1p)),
                wspec((d_h1p, d_fp)),
                wspec((1, d_fp)),
                wspec((d_fp, d_outp)),
                wspec((1, d_outp)),
            ],
            out_specs=(
                pl.BlockSpec((tb, d_outp), lambda i: (i, 0)),   # pred tile
                pl.BlockSpec((tb, 1), lambda i: (i, 0)),        # per-row CE partials
            ),
        )
        return pl.pallas_call(
            kernel,
            out_shape=out_shape,
            grid_spec=grid_spec,
            compiler_params=pltpu.CompilerParams(
                dimension_semantics=("parallel",),
                vmem_limit_bytes=vmem_limit,
            ),
        )

    args = (x, y, fused["w1"], fused["b1"], fused["w2"], fused["b2"],
            fused["w3"], fused["b3"])
    try:
        # weights/biases never change across the batch grid -> single buffer
        pred_p, ce_rows = jax.block_until_ready(build(pl.Buffered(1))(*args))
    except Exception:
        # fallback for jax versions without pipeline_mode / Buffered(1)
        pred_p, ce_rows = jax.block_until_ready(build(None)(*args))

    pred = pred_p[:, :d_out].astype(jnp.float32)        # 'inf' output
    # 'eval' batchmean KL: sum_j y*(log y - logp) / B; entropy term hoisted here.
    safe_y = jnp.where(y > 0, y, 1.0)
    ent = jnp.sum(jnp.where(y > 0, y * jnp.log(safe_y), 0.0))
    loss = (ent - jnp.sum(ce_rows)) / B
    return pred, loss


# ----------------------------------------------------------------------------
# Reference (pure JAX, f32, unfused) — mirrors the PyTorch eval forward.
# ----------------------------------------------------------------------------
def spada_reference(x, y, params, eps=BN_EPS):
    def bn(h, g, be, m, v):
        return (h - m) * jax.lax.rsqrt(v + eps) * g + be

    h = _elu(bn(x @ params["w1"] + params["b1"],
                params["g1"], params["be1"], params["m1"], params["v1"]))
    z = _elu(bn(h @ params["w2"] + params["b2"],
                params["g2"], params["be2"], params["m2"], params["v2"]))
    logits = z @ params["w3"] + params["b3"]
    pred = jax.nn.softmax(logits, axis=1)
    loss = jnp.sum(y * (jnp.log(y) - jnp.log(pred))) / x.shape[0]
    return pred, loss


def init_params(key, dims):
    """dims = [d_in, d_hid1, d_feat, d_dc_hid, d_out]; fe: d_in->d_hid1->d_feat,
    sc: d_feat->d_out. BN params like PyTorch defaults with small perturbations."""
    d_in, d_h1, d_feat, _, d_out = dims
    keys = jax.random.split(key, 12)

    def lin(kw, kb, fan_in, fan_out):
        bound = 1.0 / jnp.sqrt(fan_in)
        w = jax.random.uniform(kw, (fan_in, fan_out), jnp.float32, -bound, bound)
        b = jax.random.uniform(kb, (1, fan_out), jnp.float32, -bound, bound)
        return w, b

    w1, b1 = lin(keys[0], keys[1], d_in, d_h1)
    w2, b2 = lin(keys[2], keys[3], d_h1, d_feat)
    w3, b3 = lin(keys[4], keys[5], d_feat, d_out)

    def bn(kg, kb, km, n):
        g = 1.0 + 0.1 * jax.random.normal(kg, (1, n), jnp.float32)
        be = 0.1 * jax.random.normal(kb, (1, n), jnp.float32)
        m = 0.05 * jax.random.normal(km, (1, n), jnp.float32)
        v = jnp.ones((1, n), jnp.float32)
        return g, be, m, v

    g1, be1, m1, v1 = bn(keys[6], keys[7], keys[8], d_h1)
    g2, be2, m2, v2 = bn(keys[9], keys[10], keys[11], d_feat)

    return dict(
        w1=w1, b1=b1, g1=g1, be1=be1, m1=m1, v1=v1,
        w2=w2, b2=b2, g2=g2, be2=be2, m2=m2, v2=v2,
        w3=w3, b3=b3,
    )


if __name__ == "__main__":
    # dims = [gene_dim, hid1, feat_dim, dc_hid, n_cell_types]
    dims = [32, 64, 32, 16, 8]
    B = 8

    key = jax.random.PRNGKey(0)
    kx, ky, kp = jax.random.split(key, 3)

    # producer-side bf16 x: the kernel streams it directly (no wrapper recast pass)
    x = jax.random.normal(kx, (B, dims[0]), jnp.float32).astype(jnp.bfloat16)
    # target label distribution (rows sum to 1, all positive)
    y = jax.nn.softmax(jax.random.normal(ky, (B, dims[-1]), jnp.float32), axis=1)

    params = init_params(kp, dims)
    fused = prepare_params(params)  # BN-folded, lane-padded, bf16 weights

    pred, loss = spada_forward(x, y, fused, d_out=dims[-1])
    jax.block_until_ready((pred, loss))

    pred_ref, loss_ref = spada_reference(x.astype(jnp.float32), y, params)

    assert pred.shape == (B, dims[-1])
    assert bool(jnp.all(jnp.isfinite(pred)))
    # bf16 pred writeback + approx reciprocal -> slightly loose row-sum check
    assert bool(jnp.allclose(jnp.sum(pred, axis=1), 1.0, atol=2e-2))
    # bf16 MXU inputs/intermediates -> loose tolerance vs f32 reference
    assert bool(jnp.allclose(pred, pred_ref, atol=5e-2))
    assert bool(jnp.isfinite(loss))
    assert bool(jnp.allclose(loss, loss_ref, atol=5e-2))

    print("KERNEL_OK")
</pallas_src>

<mosaic_0001>
module attributes {stable_mosaic.version = 11 : i64} {
  func.func @spada_fwd_kernel(%arg0: i32, %arg1: memref<8x32xbf16, #tpu.memory_space<vmem>>, %arg2: memref<8x8xf32, #tpu.memory_space<vmem>>, %arg3: memref<32x128xbf16, #tpu.memory_space<vmem>>, %arg4: memref<1x128xf32, #tpu.memory_space<vmem>>, %arg5: memref<128x128xbf16, #tpu.memory_space<vmem>>, %arg6: memref<1x128xf32, #tpu.memory_space<vmem>>, %arg7: memref<128x128xbf16, #tpu.memory_space<vmem>>, %arg8: memref<1x128xf32, #tpu.memory_space<vmem>>, %arg9: memref<8x128xbf16, #tpu.memory_space<vmem>>, %arg10: memref<8x1xf32, #tpu.memory_space<vmem>>) attributes {dimension_semantics = [#tpu.dimension_semantics<parallel>], iteration_bounds = array<i64: 1>, scalar_prefetch = 0 : i64, scratch_operands = 0 : i64, tpu.core_type = #tpu.core_type<tc>, window_params = [{transform_indices = @transform_0, window_bounds = array<i64: 8, 32>}, {transform_indices = @transform_1, window_bounds = array<i64: 8, 8>}, {pipeline_mode = #tpu.pipeline_mode<synchronous>, transform_indices = @transform_2, window_bounds = array<i64: 32, 128>}, {pipeline_mode = #tpu.pipeline_mode<synchronous>, transform_indices = @transform_3, window_bounds = array<i64: 1, 128>}, {pipeline_mode = #tpu.pipeline_mode<synchronous>, transform_indices = @transform_4, window_bounds = array<i64: 128, 128>}, {pipeline_mode = #tpu.pipeline_mode<synchronous>, transform_indices = @transform_5, window_bounds = array<i64: 1, 128>}, {pipeline_mode = #tpu.pipeline_mode<synchronous>, transform_indices = @transform_6, window_bounds = array<i64: 128, 128>}, {pipeline_mode = #tpu.pipeline_mode<synchronous>, transform_indices = @transform_7, window_bounds = array<i64: 1, 128>}, {transform_indices = @transform_8, window_bounds = array<i64: 8, 128>}, {transform_indices = @transform_9, window_bounds = array<i64: 8, 1>}]} {
    %c0 = arith.constant 0 : index
    %c0_0 = arith.constant 0 : index
    %0 = vector.load %arg1[%c0, %c0_0] : memref<8x32xbf16, #tpu.memory_space<vmem>>, vector<8x32xbf16>
    %c0_1 = arith.constant 0 : index
    %c0_2 = arith.constant 0 : index
    %1 = vector.load %arg3[%c0_1, %c0_2] : memref<32x128xbf16, #tpu.memory_space<vmem>>, vector<32x128xbf16>
    %cst = arith.constant dense<0.000000e+00> : vector<8x128xf32>
    %2 = tpu.matmul %0, %1, %cst {dimension_numbers = #tpu.dot_dimension_numbers<[1], [0], [0], [1], [0, 0, 1, 1], [], []>} : vector<8x32xbf16>, vector<32x128xbf16>, vector<8x128xf32> -> vector<8x128xf32>
    %c0_3 = arith.constant 0 : index
    %c0_4 = arith.constant 0 : index
    %3 = vector.load %arg4[%c0_3, %c0_4] : memref<1x128xf32, #tpu.memory_space<vmem>>, vector<1x128xf32>
    %4 = vector.broadcast %3 : vector<1x128xf32> to vector<8x128xf32>
    %5 = arith.addf %2, %4 : vector<8x128xf32>
    %cst_5 = arith.constant 0.000000e+00 : f32
    %6 = vector.broadcast %cst_5 : f32 to vector<8x128xf32>
    %7 = arith.cmpf ogt, %5, %6 : vector<8x128xf32>
    %cst_6 = arith.constant 0.000000e+00 : f32
    %8 = vector.broadcast %cst_6 : f32 to vector<8x128xf32>
    %9 = arith.minimumf %5, %8 : vector<8x128xf32>
    %10 = math.exp %9 : vector<8x128xf32>
    %cst_7 = arith.constant 1.000000e+00 : f32
    %11 = vector.broadcast %cst_7 : f32 to vector<8x128xf32>
    %12 = arith.subf %10, %11 : vector<8x128xf32>
    %13 = arith.select %7, %5, %12 : vector<8x128xi1>, vector<8x128xf32>
    %14 = arith.truncf %13 : vector<8x128xf32> to vector<8x128xbf16>
    %c0_8 = arith.constant 0 : index
    %c0_9 = arith.constant 0 : index
    %15 = vector.load %arg5[%c0_8, %c0_9] : memref<128x128xbf16, #tpu.memory_space<vmem>>, vector<128x128xbf16>
    %cst_10 = arith.constant dense<0.000000e+00> : vector<8x128xf32>
    %16 = tpu.matmul %14, %15, %cst_10 {dimension_numbers = #tpu.dot_dimension_numbers<[1], [0], [0], [1], [0, 0, 1, 1], [], []>} : vector<8x128xbf16>, vector<128x128xbf16>, vector<8x128xf32> -> vector<8x128xf32>
    %c0_11 = arith.constant 0 : index
    %c0_12 = arith.constant 0 : index
    %17 = vector.load %arg6[%c0_11, %c0_12] : memref<1x128xf32, #tpu.memory_space<vmem>>, vector<1x128xf32>
    %18 = vector.broadcast %17 : vector<1x128xf32> to vector<8x128xf32>
    %19 = arith.addf %16, %18 : vector<8x128xf32>
    %cst_13 = arith.constant 0.000000e+00 : f32
    %20 = vector.broadcast %cst_13 : f32 to vector<8x128xf32>
    %21 = arith.cmpf ogt, %19, %20 : vector<8x128xf32>
    %cst_14 = arith.constant 0.000000e+00 : f32
    %22 = vector.broadcast %cst_14 : f32 to vector<8x128xf32>
    %23 = arith.minimumf %19, %22 : vector<8x128xf32>
    %24 = math.exp %23 : vector<8x128xf32>
    %cst_15 = arith.constant 1.000000e+00 : f32
    %25 = vector.broadcast %cst_15 : f32 to vector<8x128xf32>
    %26 = arith.subf %24, %25 : vector<8x128xf32>
    %27 = arith.select %21, %19, %26 : vector<8x128xi1>, vector<8x128xf32>
    %28 = arith.truncf %27 : vector<8x128xf32> to vector<8x128xbf16>
    %c0_16 = arith.constant 0 : index
    %c0_17 = arith.constant 0 : index
    %29 = vector.load %arg7[%c0_16, %c0_17] : memref<128x128xbf16, #tpu.memory_space<vmem>>, vector<128x128xbf16>
    %cst_18 = arith.constant dense<0.000000e+00> : vector<8x128xf32>
    %30 = tpu.matmul %28, %29, %cst_18 {dimension_numbers = #tpu.dot_dimension_numbers<[1], [0], [0], [1], [0, 0, 1, 1], [], []>} : vector<8x128xbf16>, vector<128x128xbf16>, vector<8x128xf32> -> vector<8x128xf32>
    %c0_19 = arith.constant 0 : index
    %c0_20 = arith.constant 0 : index
    %31 = vector.load %arg8[%c0_19, %c0_20] : memref<1x128xf32, #tpu.memory_space<vmem>>, vector<1x128xf32>
    %32 = vector.broadcast %31 : vector<1x128xf32> to vector<8x128xf32>
    %33 = arith.addf %30, %32 : vector<8x128xf32>
    %cst_21 = arith.constant dense<0xFF800000> : vector<8xf32>
    %34 = vector.multi_reduction <maximumf>, %33, %cst_21 [1] : vector<8x128xf32> to vector<8xf32>
    %35 = vector.shape_cast %34 : vector<8xf32> to vector<8x1xf32>
    %36 = vector.broadcast %35 : vector<8x1xf32> to vector<8x128xf32>
    %37 = arith.subf %33, %36 : vector<8x128xf32>
    %38 = math.exp %37 : vector<8x128xf32>
    %cst_22 = arith.constant dense<0.000000e+00> : vector<8xf32>
    %39 = vector.multi_reduction <add>, %38, %cst_22 [1] : vector<8x128xf32> to vector<8xf32>
    %40 = vector.shape_cast %39 : vector<8xf32> to vector<8x1xf32>
    %41 = tpu.reciprocal %40 {approx = true} : vector<8x1xf32> -> vector<8x1xf32>
    %42 = vector.broadcast %41 : vector<8x1xf32> to vector<8x128xf32>
    %43 = arith.mulf %38, %42 : vector<8x128xf32>
    %44 = arith.truncf %43 : vector<8x128xf32> to vector<8x128xbf16>
    %c0_23 = arith.constant 0 : index
    %c0_24 = arith.constant 0 : index
    %45 = vector.load %arg9[%c0_23, %c0_24] : memref<8x128xbf16, #tpu.memory_space<vmem>>, vector<8x128xbf16>
    tpu.vector_store %arg9[%c0_23, %c0_24], %44 {strides = array<i32>} : memref<8x128xbf16, #tpu.memory_space<vmem>>, vector<8x128xbf16>,
    %46 = math.log %40 : vector<8x1xf32>
    %47 = vector.broadcast %46 : vector<8x1xf32> to vector<8x128xf32>
    %48 = arith.subf %37, %47 : vector<8x128xf32>
    %c0_25 = arith.constant 0 : index
    %c0_26 = arith.constant 0 : index
    %49 = vector.load %arg2[%c0_25, %c0_26] : memref<8x8xf32, #tpu.memory_space<vmem>>, vector<8x8xf32>
    %50 = vector.extract_strided_slice %48 {offsets = [0, 0], sizes = [8, 8], strides = [1, 1]} : vector<8x128xf32> to vector<8x8xf32>
    %51 = arith.mulf %49, %50 : vector<8x8xf32>
    %cst_27 = arith.constant dense<0.000000e+00> : vector<8xf32>
    %52 = vector.multi_reduction <add>, %51, %cst_27 [1] : vector<8x8xf32> to vector<8xf32>
    %53 = vector.shape_cast %52 : vector<8xf32> to vector<8x1xf32>
    %c0_28 = arith.constant 0 : index
    %c0_29 = arith.constant 0 : index
    %54 = vector.load %arg10[%c0_28, %c0_29] : memref<8x1xf32, #tpu.memory_space<vmem>>, vector<8x1xf32>
    tpu.vector_store %arg10[%c0_28, %c0_29], %53 {strides = array<i32>} : memref<8x1xf32, #tpu.memory_space<vmem>>, vector<8x1xf32>,
    return
  }
  func.func @transform_0(%arg0: i32) -> (i32, i32) {
    %c0_i32 = arith.constant 0 : i32
    %c0_i32_0 = arith.constant 0 : i32
    return %arg0, %c0_i32 : i32, i32
  }
  func.func @transform_1(%arg0: i32) -> (i32, i32) {
    %c0_i32 = arith.constant 0 : i32
    %c0_i32_0 = arith.constant 0 : i32
    return %arg0, %c0_i32 : i32, i32
  }
  func.func @transform_2(%arg0: i32) -> (i32, i32) {
    %c0_i32 = arith.constant 0 : i32
    %c0_i32_0 = arith.constant 0 : i32
    %c0_i32_1 = arith.constant 0 : i32
    return %c0_i32, %c0_i32_0 : i32, i32
  }
  func.func @transform_3(%arg0: i32) -> (i32, i32) {
    %c0_i32 = arith.constant 0 : i32
    %c0_i32_0 = arith.constant 0 : i32
    %c0_i32_1 = arith.constant 0 : i32
    return %c0_i32, %c0_i32_0 : i32, i32
  }
  func.func @transform_4(%arg0: i32) -> (i32, i32) {
    %c0_i32 = arith.constant 0 : i32
    %c0_i32_0 = arith.constant 0 : i32
    %c0_i32_1 = arith.constant 0 : i32
    return %c0_i32, %c0_i32_0 : i32, i32
  }
  func.func @transform_5(%arg0: i32) -> (i32, i32) {
    %c0_i32 = arith.constant 0 : i32
    %c0_i32_0 = arith.constant 0 : i32
    %c0_i32_1 = arith.constant 0 : i32
    return %c0_i32, %c0_i32_0 : i32, i32
  }
  func.func @transform_6(%arg0: i32) -> (i32, i32) {
    %c0_i32 = arith.constant 0 : i32
    %c0_i32_0 = arith.constant 0 : i32
    %c0_i32_1 = arith.constant 0 : i32
    return %c0_i32, %c0_i32_0 : i32, i32
  }
  func.func @transform_7(%arg0: i32) -> (i32, i32) {
    %c0_i32 = arith.constant 0 : i32
    %c0_i32_0 = arith.constant 0 : i32
    %c0_i32_1 = arith.constant 0 : i32
    return %c0_i32, %c0_i32_0 : i32, i32
  }
  func.func @transform_8(%arg0: i32) -> (i32, i32) {
    %c0_i32 = arith.constant 0 : i32
    %c0_i32_0 = arith.constant 0 : i32
    return %arg0, %c0_i32 : i32, i32
  }
  func.func @transform_9(%arg0: i32) -> (i32, i32) {
    %c0_i32 = arith.constant 0 : i32
    %c0_i32_0 = arith.constant 0 : i32
    return %arg0, %c0_i32 : i32, i32
  }
}

module attributes {stable_mosaic.version = 11 : i64} {
  func.func @spada_fwd_kernel(%arg0: i32, %arg1: memref<8x32xbf16, #tpu.memory_space<vmem>>, %arg2: memref<8x8xf32, #tpu.memory_space<vmem>>, %arg3: memref<32x128xbf16, #tpu.memory_space<vmem>>, %arg4: memref<1x128xf32, #tpu.memory_space<vmem>>, %arg5: memref<128x128xbf16, #tpu.memory_space<vmem>>, %arg6: memref<1x128xf32, #tpu.memory_space<vmem>>, %arg7: memref<128x128xbf16, #tpu.memory_space<vmem>>, %arg8: memref<1x128xf32, #tpu.memory_space<vmem>>, %arg9: memref<8x128xbf16, #tpu.memory_space<vmem>>, %arg10: memref<8x1xf32, #tpu.memory_space<vmem>>) attributes {dimension_semantics = [#tpu.dimension_semantics<parallel>], iteration_bounds = array<i64: 1>, scalar_prefetch = 0 : i64, scratch_operands = 0 : i64, tpu.core_type = #tpu.core_type<tc>, window_params = [{transform_indices = @transform_0, window_bounds = array<i64: 8, 32>}, {transform_indices = @transform_1, window_bounds = array<i64: 8, 8>}, {pipeline_mode = #tpu.pipeline_mode<synchronous>, transform_indices = @transform_2, window_bounds = array<i64: 32, 128>}, {pipeline_mode = #tpu.pipeline_mode<synchronous>, transform_indices = @transform_3, window_bounds = array<i64: 1, 128>}, {pipeline_mode = #tpu.pipeline_mode<synchronous>, transform_indices = @transform_4, window_bounds = array<i64: 128, 128>}, {pipeline_mode = #tpu.pipeline_mode<synchronous>, transform_indices = @transform_5, window_bounds = array<i64: 1, 128>}, {pipeline_mode = #tpu.pipeline_mode<synchronous>, transform_indices = @transform_6, window_bounds = array<i64: 128, 128>}, {pipeline_mode = #tpu.pipeline_mode<synchronous>, transform_indices = @transform_7, window_bounds = array<i64: 1, 128>}, {transform_indices = @transform_8, window_bounds = array<i64: 8, 128>}, {transform_indices = @transform_9, window_bounds = array<i64: 8, 1>}]} {
    %c0 = arith.constant 0 : index
    %c0_0 = arith.constant 0 : index
    %0 = vector.load %arg1[%c0, %c0_0] : memref<8x32xbf16, #tpu.memory_space<vmem>>, vector<8x32xbf16>
    %c0_1 = arith.constant 0 : index
    %c0_2 = arith.constant 0 : index
    %1 = vector.load %arg3[%c0_1, %c0_2] : memref<32x128xbf16, #tpu.memory_space<vmem>>, vector<32x128xbf16>
    %cst = arith.constant dense<0.000000e+00> : vector<8x128xf32>
    %2 = tpu.matmul %0, %1, %cst {dimension_numbers = #tpu.dot_dimension_numbers<[1], [0], [0], [1], [0, 0, 1, 1], [], []>} : vector<8x32xbf16>, vector<32x128xbf16>, vector<8x128xf32> -> vector<8x128xf32>
    %c0_3 = arith.constant 0 : index
    %c0_4 = arith.constant 0 : index
    %3 = vector.load %arg4[%c0_3, %c0_4] : memref<1x128xf32, #tpu.memory_space<vmem>>, vector<1x128xf32>
    %4 = vector.broadcast %3 : vector<1x128xf32> to vector<8x128xf32>
    %5 = arith.addf %2, %4 : vector<8x128xf32>
    %cst_5 = arith.constant 0.000000e+00 : f32
    %6 = vector.broadcast %cst_5 : f32 to vector<8x128xf32>
    %7 = arith.cmpf ogt, %5, %6 : vector<8x128xf32>
    %cst_6 = arith.constant 0.000000e+00 : f32
    %8 = vector.broadcast %cst_6 : f32 to vector<8x128xf32>
    %9 = arith.minimumf %5, %8 : vector<8x128xf32>
    %10 = math.exp %9 : vector<8x128xf32>
    %cst_7 = arith.constant 1.000000e+00 : f32
    %11 = vector.broadcast %cst_7 : f32 to vector<8x128xf32>
    %12 = arith.subf %10, %11 : vector<8x128xf32>
    %13 = arith.select %7, %5, %12 : vector<8x128xi1>, vector<8x128xf32>
    %14 = arith.truncf %13 : vector<8x128xf32> to vector<8x128xbf16>
    %c0_8 = arith.constant 0 : index
    %c0_9 = arith.constant 0 : index
    %15 = vector.load %arg5[%c0_8, %c0_9] : memref<128x128xbf16, #tpu.memory_space<vmem>>, vector<128x128xbf16>
    %cst_10 = arith.constant dense<0.000000e+00> : vector<8x128xf32>
    %16 = tpu.matmul %14, %15, %cst_10 {dimension_numbers = #tpu.dot_dimension_numbers<[1], [0], [0], [1], [0, 0, 1, 1], [], []>} : vector<8x128xbf16>, vector<128x128xbf16>, vector<8x128xf32> -> vector<8x128xf32>
    %c0_11 = arith.constant 0 : index
    %c0_12 = arith.constant 0 : index
    %17 = vector.load %arg6[%c0_11, %c0_12] : memref<1x128xf32, #tpu.memory_space<vmem>>, vector<1x128xf32>
    %18 = vector.broadcast %17 : vector<1x128xf32> to vector<8x128xf32>
    %19 = arith.addf %16, %18 : vector<8x128xf32>
    %cst_13 = arith.constant 0.000000e+00 : f32
    %20 = vector.broadcast %cst_13 : f32 to vector<8x128xf32>
    %21 = arith.cmpf ogt, %19, %20 : vector<8x128xf32>
    %cst_14 = arith.constant 0.000000e+00 : f32
    %22 = vector.broadcast %cst_14 : f32 to vector<8x128xf32>
    %23 = arith.minimumf %19, %22 : vector<8x128xf32>
    %24 = math.exp %23 : vector<8x128xf32>
    %cst_15 = arith.constant 1.000000e+00 : f32
    %25 = vector.broadcast %cst_15 : f32 to vector<8x128xf32>
    %26 = arith.subf %24, %25 : vector<8x128xf32>
    %27 = arith.select %21, %19, %26 : vector<8x128xi1>, vector<8x128xf32>
    %28 = arith.truncf %27 : vector<8x128xf32> to vector<8x128xbf16>
    %c0_16 = arith.constant 0 : index
    %c0_17 = arith.constant 0 : index
    %29 = vector.load %arg7[%c0_16, %c0_17] : memref<128x128xbf16, #tpu.memory_space<vmem>>, vector<128x128xbf16>
    %cst_18 = arith.constant dense<0.000000e+00> : vector<8x128xf32>
    %30 = tpu.matmul %28, %29, %cst_18 {dimension_numbers = #tpu.dot_dimension_numbers<[1], [0], [0], [1], [0, 0, 1, 1], [], []>} : vector<8x128xbf16>, vector<128x128xbf16>, vector<8x128xf32> -> vector<8x128xf32>
    %c0_19 = arith.constant 0 : index
    %c0_20 = arith.constant 0 : index
    %31 = vector.load %arg8[%c0_19, %c0_20] : memref<1x128xf32, #tpu.memory_space<vmem>>, vector<1x128xf32>
    %32 = vector.broadcast %31 : vector<1x128xf32> to vector<8x128xf32>
    %33 = arith.addf %30, %32 : vector<8x128xf32>
    %cst_21 = arith.constant dense<0xFF800000> : vector<8xf32>
    %34 = vector.multi_reduction <maximumf>, %33, %cst_21 [1] : vector<8x128xf32> to vector<8xf32>
    %35 = vector.shape_cast %34 : vector<8xf32> to vector<8x1xf32>
    %36 = vector.broadcast %35 : vector<8x1xf32> to vector<8x128xf32>
    %37 = arith.subf %33, %36 : vector<8x128xf32>
    %38 = math.exp %37 : vector<8x128xf32>
    %cst_22 = arith.constant dense<0.000000e+00> : vector<8xf32>
    %39 = vector.multi_reduction <add>, %38, %cst_22 [1] : vector<8x128xf32> to vector<8xf32>
    %40 = vector.shape_cast %39 : vector<8xf32> to vector<8x1xf32>
    %41 = tpu.reciprocal %40 {approx = true} : vector<8x1xf32> -> vector<8x1xf32>
    %42 = vector.broadcast %41 : vector<8x1xf32> to vector<8x128xf32>
    %43 = arith.mulf %38, %42 : vector<8x128xf32>
    %44 = arith.truncf %43 : vector<8x128xf32> to vector<8x128xbf16>
    %c0_23 = arith.constant 0 : index
    %c0_24 = arith.constant 0 : index
    %45 = vector.load %arg9[%c0_23, %c0_24] : memref<8x128xbf16, #tpu.memory_space<vmem>>, vector<8x128xbf16>
    tpu.vector_store %arg9[%c0_23, %c0_24], %44 {strides = array<i32>} : memref<8x128xbf16, #tpu.memory_space<vmem>>, vector<8x128xbf16>,
    %46 = math.log %40 : vector<8x1xf32>
    %47 = vector.broadcast %46 : vector<8x1xf32> to vector<8x128xf32>
    %48 = arith.subf %37, %47 : vector<8x128xf32>
    %c0_25 = arith.constant 0 : index
    %c0_26 = arith.constant 0 : index
    %49 = vector.load %arg2[%c0_25, %c0_26] : memref<8x8xf32, #tpu.memory_space<vmem>>, vector<8x8xf32>
    %50 = vector.extract_strided_slice %48 {offsets = [0, 0], sizes = [8, 8], strides = [1, 1]} : vector<8x128xf32> to vector<8x8xf32>
    %51 = arith.mulf %49, %50 : vector<8x8xf32>
    %cst_27 = arith.constant dense<0.000000e+00> : vector<8xf32>
    %52 = vector.multi_reduction <add>, %51, %cst_27 [1] : vector<8x8xf32> to vector<8xf32>
    %53 = vector.shape_cast %52 : vector<8xf32> to vector<8x1xf32>
    %c0_28 = arith.constant 0 : index
    %c0_29 = arith.constant 0 : index
    %54 = vector.load %arg10[%c0_28, %c0_29] : memref<8x1xf32, #tpu.memory_space<vmem>>, vector<8x1xf32>
    tpu.vector_store %arg10[%c0_28, %c0_29], %53 {strides = array<i32>} : memref<8x1xf32, #tpu.memory_space<vmem>>, vector<8x1xf32>,
    return
  }
  func.func @transform_0(%arg0: i32) -> (i32, i32) {
    %c0_i32 = arith.constant 0 : i32
    %c0_i32_0 = arith.constant 0 : i32
    return %arg0, %c0_i32 : i32, i32
  }
  func.func @transform_1(%arg0: i32) -> (i32, i32) {
    %c0_i32 = arith.constant 0 : i32
    %c0_i32_0 = arith.constant 0 : i32
    return %arg0, %c0_i32 : i32, i32
  }
  func.func @transform_2(%arg0: i32) -> (i32, i32) {
    %c0_i32 = arith.constant 0 : i32
    %c0_i32_0 = arith.constant 0 : i32
    %c0_i32_1 = arith.constant 0 : i32
    return %c0_i32, %c0_i32_0 : i32, i32
  }
  func.func @transform_3(%arg0: i32) -> (i32, i32) {
    %c0_i32 = arith.constant 0 : i32
    %c0_i32_0 = arith.constant 0 : i32
    %c0_i32_1 = arith.constant 0 : i32
    return %c0_i32, %c0_i32_0 : i32, i32
  }
  func.func @transform_4(%arg0: i32) -> (i32, i32) {
    %c0_i32 = arith.constant 0 : i32
    %c0_i32_0 = arith.constant 0 : i32
    %c0_i32_1 = arith.constant 0 : i32
    return %c0_i32, %c0_i32_0 : i32, i32
  }
  func.func @transform_5(%arg0: i32) -> (i32, i32) {
    %c0_i32 = arith.constant 0 : i32
    %c0_i32_0 = arith.constant 0 : i32
    %c0_i32_1 = arith.constant 0 : i32
    return %c0_i32, %c0_i32_0 : i32, i32
  }
  func.func @transform_6(%arg0: i32) -> (i32, i32) {
    %c0_i32 = arith.constant 0 : i32
    %c0_i32_0 = arith.constant 0 : i32
    %c0_i32_1 = arith.constant 0 : i32
    return %c0_i32, %c0_i32_0 : i32, i32
  }
  func.func @transform_7(%arg0: i32) -> (i32, i32) {
    %c0_i32 = arith.constant 0 : i32
    %c0_i32_0 = arith.constant 0 : i32
    %c0_i32_1 = arith.constant 0 : i32
    return %c0_i32, %c0_i32_0 : i32, i32
  }
  func.func @transform_8(%arg0: i32) -> (i32, i32) {
    %c0_i32 = arith.constant 0 : i32
    %c0_i32_0 = arith.constant 0 : i32
    return %arg0, %c0_i32 : i32, i32
  }
  func.func @transform_9(%arg0: i32) -> (i32, i32) {
    %c0_i32 = arith.constant 0 : i32
    %c0_i32_0 = arith.constant 0 : i32
    return %arg0, %c0_i32 : i32, i32
  }
}

</mosaic_0001>

<llo_original>
// kernel: tpu_custom_call.1
$region0: #{tpu_custom_call.1}
  #allocation0 [shape = 'u32[]', space=smem, size = 0x4, offset = 0x4, fixed_abs, tag = 'smem constant byte address 0x4 - core index']
  #allocation1 [shape = 'u32[144,128]{1,0:T(1,128)}', space=vmem, size = 0x12000, scoped, tag = 'internal scratch']
  %s0 = inlined_call_operand.hbm [shape: bf16[8,32], index: 0, kind: input, shape index: {}]
  %s1 = inlined_call_operand.hbm [shape: f32[8,8], index: 1, kind: input, shape index: {}]
  %s2 = inlined_call_operand.hbm [shape: bf16[32,128], index: 2, kind: input, shape index: {}]
  %s3 = inlined_call_operand.vmem [shape: f32[1,128], index: 3, kind: input, shape index: {}]
  %s4 = inlined_call_operand.hbm [shape: bf16[128,128], index: 4, kind: input, shape index: {}]
  %s5 = inlined_call_operand.vmem [shape: f32[1,128], index: 5, kind: input, shape index: {}]
  %s6 = inlined_call_operand.hbm [shape: bf16[128,128], index: 6, kind: input, shape index: {}]
  %s7 = inlined_call_operand.vmem [shape: f32[1,128], index: 7, kind: input, shape index: {}]
  %s8 = inlined_call_operand.hbm [shape: bf16[8,128], index: 8, kind: output, shape index: {0}]
  %s9 = inlined_call_operand.vmem [shape: f32[8,1], index: 9, kind: output, shape index: {1}]
  %10 = xla_tuple %s8, %s9
  %s11 = sld [smem:[#allocation0]]
  $region70: #{tpu_custom_call.1} parent=0
    _
  %s13 = ssub.s32 1, %s11
  %s14 = scalar_select 0, %s13, %s11
  $region1: #{tpu_custom_call.1} parent=0
    #allocation2 [shape = 'u8[2048]{0}', space=vmem, size = 0x800, scoped, tag = 'input window, operand 0, single buffered']
    #allocation3 [shape = 's32[1]{0}', space=sflag, size = 0x4, scoped, tag = 'scoped memory for tpu_custom_call.1']
    #allocation4 [shape = 's32[1]{0}', space=sflag, size = 0x4, scoped, tag = 'scoped memory for tpu_custom_call.1']
    #allocation5 [shape = 'u8[4096]{0}', space=vmem, size = 0x1000, scoped, tag = 'input window, operand 1, single buffered']
    #allocation6 [shape = 's32[1]{0}', space=sflag, size = 0x4, scoped, tag = 'scoped memory for tpu_custom_call.1']
    #allocation7 [shape = 'u8[8192]{0}', space=vmem, size = 0x2000, scoped, tag = 'input window, operand 2, single buffered']
    #allocation8 [shape = 'u8[32768]{0}', space=vmem, size = 0x8000, scoped, tag = 'input window, operand 4, single buffered']
    #allocation9 [shape = 's32[1]{0}', space=sflag, size = 0x4, scoped, tag = 'scoped memory for tpu_custom_call.1']
    #allocation10 [shape = 'u8[32768]{0}', space=vmem, size = 0x8000, scoped, tag = 'input window, operand 6, single buffered']
    #allocation11 [shape = 'u8[2048]{0}', space=vmem, size = 0x800, scoped, tag = 'output window, operand 0, single buffered']
    %15 = vsyncpa [#allocation3], 0
    %16 = vsyncpa [#allocation6], 0
    %17 = vsyncpa [#allocation9], 0
    %18 = vsyncpa [#allocation4], 0
    // Predicated region
    $region2: #{tpu_custom_call.1} parent=1 // pred_check
      _
    $region3: #{tpu_custom_call.1} parent=1 // pred_check_branch
      %20 = sbr.rel (0) target = $region5
    $region4: #{tpu_custom_call.1} parent=1 // pred_region
      %s22 = ssub.s32 64, 64
      %23 = vsyncadd [#allocation3], %s22
      %s25 = sshll.u32 [#allocation2], 4
      %s26 = int_to_ptr.vmem [resolvable:$true] %s25
      %28 = dma.hbm_to_vmem [thread:$0]  %s0, 64, %s26, [#allocation3]
    $region5: #{tpu_custom_call.1} parent=1 // pred_fallthru
      _
    // Predicated region
    $region6: #{tpu_custom_call.1} parent=1 // pred_check
      _
    $region7: #{tpu_custom_call.1} parent=1 // pred_check_branch
      %30 = sbr.rel (0) target = $region9
    $region8: #{tpu_custom_call.1} parent=1 // pred_region
      %s32 = ssub.s32 128, 128
      %33 = vsyncadd [#allocation6], %s32
      %s35 = sshll.u32 [#allocation5], 4
      %s36 = int_to_ptr.vmem [resolvable:$true] %s35
      %38 = dma.hbm_to_vmem [thread:$0]  %s1, 128, %s36, [#allocation6]
    $region9: #{tpu_custom_call.1} parent=1 // pred_fallthru
      _
    // Predicated region
    $region10: #{tpu_custom_call.1} parent=1 // pred_check
      _
    $region11: #{tpu_custom_call.1} parent=1 // pred_check_branch
      %40 = sbr.rel (0) target = $region13
    $region12: #{tpu_custom_call.1} parent=1 // pred_region
      %s42 = ssub.s32 256, 256
      %43 = vsyncadd [#allocation6], %s42
      %s44 = sshll.u32 [#allocation7], 4
      %s45 = int_to_ptr.vmem [resolvable:$true] %s44
      %50 = dma.hbm_to_vmem [thread:$0]  %s2, 256, %s45, [#allocation6], 64, 64, 4
    $region13: #{tpu_custom_call.1} parent=1 // pred_fallthru
      _
    // Predicated region
    $region14: #{tpu_custom_call.1} parent=1 // pred_check
      _
    $region15: #{tpu_custom_call.1} parent=1 // pred_check_branch
      %52 = sbr.rel (0) target = $region17
    $region16: #{tpu_custom_call.1} parent=1 // pred_region
      _
    $region17: #{tpu_custom_call.1} parent=1 // pred_fallthru
      _
    // Predicated region
    $region18: #{tpu_custom_call.1} parent=1 // pred_check
      _
    $region19: #{tpu_custom_call.1} parent=1 // pred_check_branch
      %54 = sbr.rel (0) target = $region21
    $region20: #{tpu_custom_call.1} parent=1 // pred_region
      %s56 = ssub.s32 1024, 1024
      %57 = vsyncadd [#allocation9], %s56
      %s58 = sshll.u32 [#allocation8], 4
      %s59 = int_to_ptr.vmem [resolvable:$true] %s58
      %64 = dma.hbm_to_vmem [thread:$0]  %s4, 1024, %s59, [#allocation9], 64, 64, 4
    $region21: #{tpu_custom_call.1} parent=1 // pred_fallthru
      _
    // Predicated region
    $region22: #{tpu_custom_call.1} parent=1 // pred_check
      _
    $region23: #{tpu_custom_call.1} parent=1 // pred_check_branch
      %66 = sbr.rel (0) target = $region25
    $region24: #{tpu_custom_call.1} parent=1 // pred_region
      _
    $region25: #{tpu_custom_call.1} parent=1 // pred_fallthru
      _
    // Predicated region
    $region26: #{tpu_custom_call.1} parent=1 // pred_check
      _
    $region27: #{tpu_custom_call.1} parent=1 // pred_check_branch
      %68 = sbr.rel (0) target = $region29
    $region28: #{tpu_custom_call.1} parent=1 // pred_region
      %s70 = ssub.s32 1024, 1024
      %71 = vsyncadd [#allocation9], %s70
      %s72 = sshll.u32 [#allocation10], 4
      %s73 = int_to_ptr.vmem [resolvable:$true] %s72
      %78 = dma.hbm_to_vmem [thread:$0]  %s6, 1024, %s73, [#allocation9], 64, 64, 4
    $region29: #{tpu_custom_call.1} parent=1 // pred_fallthru
      _
    // Predicated region
    $region30: #{tpu_custom_call.1} parent=1 // pred_check
      _
    $region31: #{tpu_custom_call.1} parent=1 // pred_check_branch
      %80 = sbr.rel (0) target = $region33
    $region32: #{tpu_custom_call.1} parent=1 // pred_region
      _
    $region33: #{tpu_custom_call.1} parent=1 // pred_fallthru
      _
    // Predicated region
    $region34: #{tpu_custom_call.1} parent=1 // pred_check
      _
    $region35: #{tpu_custom_call.1} parent=1 // pred_check_branch
      %82 = sbr.rel (0) target = $region37
    $region36: #{tpu_custom_call.1} parent=1 // pred_region
      %83 = dma.done [#allocation3], 64
    $region37: #{tpu_custom_call.1} parent=1 // pred_fallthru
      _
    // Predicated region
    $region38: #{tpu_custom_call.1} parent=1 // pred_check
      _
    $region39: #{tpu_custom_call.1} parent=1 // pred_check_branch
      %85 = sbr.rel (0) target = $region41
    $region40: #{tpu_custom_call.1} parent=1 // pred_region
      %86 = dma.done [#allocation6], 128
    $region41: #{tpu_custom_call.1} parent=1 // pred_fallthru
      _
    // Predicated region
    $region42: #{tpu_custom_call.1} parent=1 // pred_check
      _
    $region43: #{tpu_custom_call.1} parent=1 // pred_check_branch
      %88 = sbr.rel (0) target = $region45
    $region44: #{tpu_custom_call.1} parent=1 // pred_region
      %89 = dma.done [#allocation6], 256
    $region45: #{tpu_custom_call.1} parent=1 // pred_fallthru
      _
    // Predicated region
    $region46: #{tpu_custom_call.1} parent=1 // pred_check
      _
    $region47: #{tpu_custom_call.1} parent=1 // pred_check_branch
      %91 = sbr.rel (0) target = $region49
    $region48: #{tpu_custom_call.1} parent=1 // pred_region
      %92 = dma.done [#allocation9], 1024
    $region49: #{tpu_custom_call.1} parent=1 // pred_fallthru
      _
    // Predicated region
    $region50: #{tpu_custom_call.1} parent=1 // pred_check
      _
    $region51: #{tpu_custom_call.1} parent=1 // pred_check_branch
      %94 = sbr.rel (0) target = $region53
    $region52: #{tpu_custom_call.1} parent=1 // pred_region
      %95 = dma.done [#allocation9], 1024
    $region53: #{tpu_custom_call.1} parent=1 // pred_fallthru
      _
    %v97 = vld [vmem:[#allocation2] sm:$0xf]
    %v98 = vld [vmem:[#allocation7] sm:$0xf]
    %v99 = vld [vmem:[#allocation7 + $0x4] sm:$0xf]
    %v100 = vld [vmem:[#allocation7 + $0x8] sm:$0xf]
    %v101 = vld [vmem:[#allocation7 + $0xc] sm:$0xf]
    %v102 = vld [vmem:[%s3] sm:$0x1]
    %v104 = vlaneseq
    %v105 = vshrl.u32 %v104, 7
    %v106 = vsub.s32 0, %v105
    %v107 = vrot.slane %v102, %v106
    %v113 = vunpack.c.l.b16 %v98
    %v114 = vunpack.c.l.b16 %v99
    %v115 = vunpack.c.l.b16 %v100
    %v116 = vunpack.c.l.b16 %v101
    %v117 = vpack.c.b16 %v114, %v113
    %v118 = vpack.c.b16 %v116, %v115
    %vm121 = vcmask 261120
    %v123 = vsel %vm121, %v97, 0
    %125 = vmatprep.subr.bf16.mxu0 0
    %126 = vmatpush1.bf16.msra.mxu0 %v117
    %127 = vmatprep.subr.bf16.mxu0 0
    %128 = vmatpush1.bf16.msra.mxu0 %v118
    %129 = vmatprep.subr.bf16.mxu0 0
    %130 = vmatpush1.bf16.msra.mxu0 0
    %131 = vmatprep.subr.bf16.mxu0 0
    %132 = vmatpush1.bf16.msra.mxu0 0
    %133 = vmatprep.subr.bf16.mxu0 0
    %134 = vmatpush1.bf16.msra.mxu0 0
    %135 = vmatprep.subr.bf16.mxu0 0
    %136 = vmatpush1.bf16.msra.mxu0 0
    %137 = vmatprep.subr.bf16.mxu0 0
    %138 = vmatpush1.bf16.msra.mxu0 0
    %139 = vmatprep.subr.bf16.mxu0 0
    %140 = vmatpush1.bf16.msra.mxu0 0
    %141 = vmatprep.subr.bf16.mxu0 0
    %142 = vmatpush1.bf16.msra.mxu0 0
    %143 = vmatprep.subr.bf16.mxu0 0
    %144 = vmatpush1.bf16.msra.mxu0 0
    %145 = vmatprep.subr.bf16.mxu0 0
    %146 = vmatpush1.bf16.msra.mxu0 0
    %147 = vmatprep.subr.bf16.mxu0 0
    %148 = vmatpush1.bf16.msra.mxu0 0
    %149 = vmatprep.subr.bf16.mxu0 0
    %150 = vmatpush1.bf16.msra.mxu0 0
    %151 = vmatprep.subr.bf16.mxu0 0
    %152 = vmatpush1.bf16.msra.mxu0 0
    %153 = vmatprep.subr.bf16.mxu0 0
    %154 = vmatpush1.bf16.msra.mxu0 0
    %155 = vmatprep.subr.bf16.mxu0 0
    %156 = vmatpush1.bf16.msra.mxu0 0
    %157 = vmatprep.mubr.bf16.mxu0 0
    %158 = vmatmul.mubr.bf16.gmra.mrb[0].mxu0 %v123
    %v159 = vpop.f32.mrb[0].mxu0
    %v160 = vadd.f32 %v107, %v159
    %v161 = vpop.f32.mrb[0].mxu0
    %v162 = vpop.f32.mrb[0].mxu0
    %v163 = vpop.f32.mrb[0].mxu0
    %164 = vdwg.mxu0
    %vm165 = vcmp.gt.f32.partialorder %v160, 0.0
    %v166 = vmin.f32 %v160, 0.0
    %v167 = vmul.f32 %v166, 1.442695
    %v168 = vpow.pop %v167
    %v169 = vsub.f32 %v168, 1.0
    %v170 = vsel %vm165, %v160, %v169
    %v171 = vpack.c.bf16 %v170, %v170
    %v172 = vld [vmem:[#allocation8] sm:$0xf]
    %v173 = vld [vmem:[#allocation8 + $0x4] sm:$0xf]
    %v174 = vld [vmem:[#allocation8 + $0x8] sm:$0xf]
    %v175 = vld [vmem:[#allocation8 + $0xc] sm:$0xf]
    %v176 = vld [vmem:[#allocation8 + $0x10] sm:$0xf]
    %v177 = vld [vmem:[#allocation8 + $0x14] sm:$0xf]
    %v178 = vld [vmem:[#allocation8 + $0x18] sm:$0xf]
    %v179 = vld [vmem:[#allocation8 + $0x1c] sm:$0xf]
    %v180 = vld [vmem:[#allocation8 + $0x20] sm:$0xf]
    %v181 = vld [vmem:[#allocation8 + $0x24] sm:$0xf]
    %v182 = vld [vmem:[#allocation8 + $0x28] sm:$0xf]
    %v183 = vld [vmem:[#allocation8 + $0x2c] sm:$0xf]
    %v184 = vld [vmem:[#allocation8 + $0x30] sm:$0xf]
    %v185 = vld [vmem:[#allocation8 + $0x34] sm:$0xf]
    %v186 = vld [vmem:[#allocation8 + $0x38] sm:$0xf]
    %v187 = vld [vmem:[#allocation8 + $0x3c] sm:$0xf]
    %v188 = vld [vmem:[%s5] sm:$0x1]
    %v190 = vlaneseq
    %v191 = vshrl.u32 %v190, 7
    %v192 = vsub.s32 0, %v191
    %v193 = vrot.slane %v188, %v192
    %v211 = vunpack.c.l.b16 %v172
    %v212 = vunpack.c.l.b16 %v173
    %v213 = vunpack.c.l.b16 %v174
    %v214 = vunpack.c.l.b16 %v175
    %v215 = vunpack.c.l.b16 %v176
    %v216 = vunpack.c.l.b16 %v177
    %v217 = vunpack.c.l.b16 %v178
    %v218 = vunpack.c.l.b16 %v179
    %v219 = vunpack.c.l.b16 %v180
    %v220 = vunpack.c.l.b16 %v181
    %v221 = vunpack.c.l.b16 %v182
    %v222 = vunpack.c.l.b16 %v183
    %v223 = vunpack.c.l.b16 %v184
    %v224 = vunpack.c.l.b16 %v185
    %v225 = vunpack.c.l.b16 %v186
    %v226 = vunpack.c.l.b16 %v187
    %v227 = vpack.c.b16 %v212, %v211
    %v228 = vpack.c.b16 %v214, %v213
    %v229 = vpack.c.b16 %v216, %v215
    %v230 = vpack.c.b16 %v218, %v217
    %v231 = vpack.c.b16 %v220, %v219
    %v232 = vpack.c.b16 %v222, %v221
    %v233 = vpack.c.b16 %v224, %v223
    %v234 = vpack.c.b16 %v226, %v225
    %243 = vmatprep.subr.bf16.mxu0 0
    %244 = vmatpush1.bf16.msra.mxu0 %v227
    %245 = vmatprep.subr.bf16.mxu0 0
    %246 = vmatpush1.bf16.msra.mxu0 %v228
    %247 = vmatprep.subr.bf16.mxu0 0
    %248 = vmatpush1.bf16.msra.mxu0 %v229
    %249 = vmatprep.subr.bf16.mxu0 0
    %250 = vmatpush1.bf16.msra.mxu0 %v230
    %251 = vmatprep.subr.bf16.mxu0 0
    %252 = vmatpush1.bf16.msra.mxu0 %v231
    %253 = vmatprep.subr.bf16.mxu0 0
    %254 = vmatpush1.bf16.msra.mxu0 %v232
    %255 = vmatprep.subr.bf16.mxu0 0
    %256 = vmatpush1.bf16.msra.mxu0 %v233
    %257 = vmatprep.subr.bf16.mxu0 0
    %258 = vmatpush1.bf16.msra.mxu0 %v234
    %259 = vmatprep.subr.bf16.mxu0 0
    %260 = vmatpush1.bf16.msra.mxu0 0
    %261 = vmatprep.subr.bf16.mxu0 0
    %262 = vmatpush1.bf16.msra.mxu0 0
    %263 = vmatprep.subr.bf16.mxu0 0
    %264 = vmatpush1.bf16.msra.mxu0 0
    %265 = vmatprep.subr.bf16.mxu0 0
    %266 = vmatpush1.bf16.msra.mxu0 0
    %267 = vmatprep.subr.bf16.mxu0 0
    %268 = vmatpush1.bf16.msra.mxu0 0
    %269 = vmatprep.subr.bf16.mxu0 0
    %270 = vmatpush1.bf16.msra.mxu0 0
    %271 = vmatprep.subr.bf16.mxu0 0
    %272 = vmatpush1.bf16.msra.mxu0 0
    %273 = vmatprep.subr.bf16.mxu0 0
    %274 = vmatpush1.bf16.msra.mxu0 0
    %275 = vmatprep.mubr.bf16.mxu0 0
    %276 = vmatmul.mubr.bf16.gmra.mrb[0].mxu0 %v171
    %v277 = vpop.f32.mrb[0].mxu0
    %v278 = vadd.f32 %v193, %v277
    %v279 = vpop.f32.mrb[0].mxu0
    %v280 = vpop.f32.mrb[0].mxu0
    %v281 = vpop.f32.mrb[0].mxu0
    %282 = vdwg.mxu0
    %vm283 = vcmp.gt.f32.partialorder %v278, 0.0
    %v284 = vmin.f32 %v278, 0.0
    %v285 = vmul.f32 %v284, 1.442695
    %v286 = vpow.pop %v285
    %v287 = vsub.f32 %v286, 1.0
    %v288 = vsel %vm283, %v278, %v287
    %v289 = vpack.c.bf16 %v288, %v288
    %v290 = vld [vmem:[#allocation10] sm:$0xf]
    %v291 = vld [vmem:[#allocation10 + $0x4] sm:$0xf]
    %v292 = vld [vmem:[#allocation10 + $0x8] sm:$0xf]
    %v293 = vld [vmem:[#allocation10 + $0xc] sm:$0xf]
    %v294 = vld [vmem:[#allocation10 + $0x10] sm:$0xf]
    %v295 = vld [vmem:[#allocation10 + $0x14] sm:$0xf]
    %v296 = vld [vmem:[#allocation10 + $0x18] sm:$0xf]
    %v297 = vld [vmem:[#allocation10 + $0x1c] sm:$0xf]
    %v298 = vld [vmem:[#allocation10 + $0x20] sm:$0xf]
    %v299 = vld [vmem:[#allocation10 + $0x24] sm:$0xf]
    %v300 = vld [vmem:[#allocation10 + $0x28] sm:$0xf]
    %v301 = vld [vmem:[#allocation10 + $0x2c] sm:$0xf]
    %v302 = vld [vmem:[#allocation10 + $0x30] sm:$0xf]
    %v303 = vld [vmem:[#allocation10 + $0x34] sm:$0xf]
    %v304 = vld [vmem:[#allocation10 + $0x38] sm:$0xf]
    %v305 = vld [vmem:[#allocation10 + $0x3c] sm:$0xf]
    %v306 = vld [vmem:[%s7] sm:$0x1]
    %v308 = vlaneseq
    %v309 = vshrl.u32 %v308, 7
    %v310 = vsub.s32 0, %v309
    %v311 = vrot.slane %v306, %v310
    %v329 = vunpack.c.l.b16 %v290
    %v330 = vunpack.c.l.b16 %v291
    %v331 = vunpack.c.l.b16 %v292
    %v332 = vunpack.c.l.b16 %v293
    %v333 = vunpack.c.l.b16 %v294
    %v334 = vunpack.c.l.b16 %v295
    %v335 = vunpack.c.l.b16 %v296
    %v336 = vunpack.c.l.b16 %v297
    %v337 = vunpack.c.l.b16 %v298
    %v338 = vunpack.c.l.b16 %v299
    %v339 = vunpack.c.l.b16 %v300
    %v340 = vunpack.c.l.b16 %v301
    %v341 = vunpack.c.l.b16 %v302
    %v342 = vunpack.c.l.b16 %v303
    %v343 = vunpack.c.l.b16 %v304
    %v344 = vunpack.c.l.b16 %v305
    %v345 = vpack.c.b16 %v330, %v329
    %v346 = vpack.c.b16 %v332, %v331
    %v347 = vpack.c.b16 %v334, %v333
    %v348 = vpack.c.b16 %v336, %v335
    %v349 = vpack.c.b16 %v338, %v337
    %v350 = vpack.c.b16 %v340, %v339
    %v351 = vpack.c.b16 %v342, %v341
    %v352 = vpack.c.b16 %v344, %v343
    %361 = vmatprep.subr.bf16.mxu0 0
    %362 = vmatpush1.bf16.msra.mxu0 %v345
    %363 = vmatprep.subr.bf16.mxu0 0
    %364 = vmatpush1.bf16.msra.mxu0 %v346
    %365 = vmatprep.subr.bf16.mxu0 0
    %366 = vmatpush1.bf16.msra.mxu0 %v347
    %367 = vmatprep.subr.bf16.mxu0 0
    %368 = vmatpush1.bf16.msra.mxu0 %v348
    %369 = vmatprep.subr.bf16.mxu0 0
    %370 = vmatpush1.bf16.msra.mxu0 %v349
    %371 = vmatprep.subr.bf16.mxu0 0
    %372 = vmatpush1.bf16.msra.mxu0 %v350
    %373 = vmatprep.subr.bf16.mxu0 0
    %374 = vmatpush1.bf16.msra.mxu0 %v351
    %375 = vmatprep.subr.bf16.mxu0 0
    %376 = vmatpush1.bf16.msra.mxu0 %v352
    %377 = vmatprep.subr.bf16.mxu0 0
    %378 = vmatpush1.bf16.msra.mxu0 0
    %379 = vmatprep.subr.bf16.mxu0 0
    %380 = vmatpush1.bf16.msra.mxu0 0
    %381 = vmatprep.subr.bf16.mxu0 0
    %382 = vmatpush1.bf16.msra.mxu0 0
    %383 = vmatprep.subr.bf16.mxu0 0
    %384 = vmatpush1.bf16.msra.mxu0 0
    %385 = vmatprep.subr.bf16.mxu0 0
    %386 = vmatpush1.bf16.msra.mxu0 0
    %387 = vmatprep.subr.bf16.mxu0 0
    %388 = vmatpush1.bf16.msra.mxu0 0
    %389 = vmatprep.subr.bf16.mxu0 0
    %390 = vmatpush1.bf16.msra.mxu0 0
    %391 = vmatprep.subr.bf16.mxu0 0
    %392 = vmatpush1.bf16.msra.mxu0 0
    %393 = vmatprep.mubr.bf16.mxu0 0
    %394 = vmatmul.mubr.bf16.gmra.mrb[0].mxu0 %v289
    %v395 = vpop.f32.mrb[0].mxu0
    %v396 = vadd.f32 %v311, %v395
    %v397 = vpop.f32.mrb[0].mxu0
    %v398 = vpop.f32.mrb[0].mxu0
    %v399 = vpop.f32.mrb[0].mxu0
    %400 = vdwg.mxu0
    %401 = vmax.xlane.f32.xlu0 %v396
    %v402 = vpop.xlane.xlu0 %401
    %v403 = vsub.f32 %v396, %v402
    %v404 = vmul.f32 %v403, 1.442695
    %v405 = vpow.pop %v404
    %406 = vadd.xlane.f32.xlu0 %v405
    %v407 = vpop.xlane.xlu0 %406
    %v408 = vrcp.pop %v407
    %v409 = vmul.f32 %v405, %v408
    %v410 = vpack.c.bf16 %v409, %v409
    %411 = vst [vmem:[#allocation11] sm:$0xf] %v410
    %v412 = vlog2.pop %v407
    %v413 = vmul.f32 %v412, 0.6931472
    %v414 = vsub.f32 %v403, %v413
    %v415 = vld [vmem:[#allocation5] sm:$0xff]
    %v416 = vmul.f32 %v415, %v414
    %vm417 = vcmask 64512
    %v418 = vsel %vm417, %v416, 0.0
    %419 = vadd.xlane.f32.xlu0 %v418
    %v420 = vpop.xlane.xlu0 %419
    %vm421 = vcmask 7168
    %422 = vst.msk [vmem:[%s9] sm:$0xff] %vm421, %v420
    // Predicated region
    $region54: #{tpu_custom_call.1} parent=1 // pred_check
      _
    $region55: #{tpu_custom_call.1} parent=1 // pred_check_branch
      %424 = sbr.rel (0) target = $region57
    $region56: #{tpu_custom_call.1} parent=1 // pred_region
      %s426 = ssub.s32 64, 64
      %427 = vsyncadd [#allocation4], %s426
      %s429 = sshll.u32 [#allocation11], 4
      %s430 = int_to_ptr.vmem [resolvable:$true] %s429
      %432 = dma.vmem_to_hbm [thread:$0]  %s430, 64, %s8, [#allocation4]
    $region57: #{tpu_custom_call.1} parent=1 // pred_fallthru
      _
    // Predicated region
    $region58: #{tpu_custom_call.1} parent=1 // pred_check
      _
    $region59: #{tpu_custom_call.1} parent=1 // pred_check_branch
      %434 = sbr.rel (0) target = $region61
    $region60: #{tpu_custom_call.1} parent=1 // pred_region
      _
    $region61: #{tpu_custom_call.1} parent=1 // pred_fallthru
      _
    // Predicated region
    $region62: #{tpu_custom_call.1} parent=1 // pred_check
      _
    $region63: #{tpu_custom_call.1} parent=1 // pred_check_branch
      %436 = sbr.rel (0) target = $region65
    $region64: #{tpu_custom_call.1} parent=1 // pred_region
      %437 = dma.done [#allocation4], 64
    $region65: #{tpu_custom_call.1} parent=1 // pred_fallthru
      _
    // Predicated region
    $region66: #{tpu_custom_call.1} parent=1 // pred_check
      _
    $region67: #{tpu_custom_call.1} parent=1 // pred_check_branch
      %439 = sbr.rel (0) target = $region69
    $region68: #{tpu_custom_call.1} parent=1 // pred_region
      _
    $region69: #{tpu_custom_call.1} parent=1 // pred_fallthru
      _
    %440 = vsyncpa [#allocation3], 1
    %441 = vsyncpa [#allocation6], 1
    %442 = vsyncpa [#allocation9], 1
    %443 = vsyncpa [#allocation4], 1

// kernel: tpu_custom_call.1
$region0: #{tpu_custom_call.1}
  #allocation0 [shape = 'u32[]', space=smem, size = 0x4, offset = 0x4, fixed_abs, tag = 'smem constant byte address 0x4 - core index']
  #allocation1 [shape = 'u32[144,128]{1,0:T(1,128)}', space=vmem, size = 0x12000, scoped, tag = 'internal scratch']
  %s0 = inlined_call_operand.hbm [shape: bf16[8,32], index: 0, kind: input, shape index: {}]
  %s1 = inlined_call_operand.hbm [shape: f32[8,8], index: 1, kind: input, shape index: {}]
  %s2 = inlined_call_operand.hbm [shape: bf16[32,128], index: 2, kind: input, shape index: {}]
  %s3 = inlined_call_operand.vmem [shape: f32[1,128], index: 3, kind: input, shape index: {}]
  %s4 = inlined_call_operand.hbm [shape: bf16[128,128], index: 4, kind: input, shape index: {}]
  %s5 = inlined_call_operand.vmem [shape: f32[1,128], index: 5, kind: input, shape index: {}]
  %s6 = inlined_call_operand.hbm [shape: bf16[128,128], index: 6, kind: input, shape index: {}]
  %s7 = inlined_call_operand.vmem [shape: f32[1,128], index: 7, kind: input, shape index: {}]
  %s8 = inlined_call_operand.hbm [shape: bf16[8,128], index: 8, kind: output, shape index: {0}]
  %s9 = inlined_call_operand.vmem [shape: f32[8,1], index: 9, kind: output, shape index: {1}]
  %10 = xla_tuple %s8, %s9
  %s11 = sld [smem:[#allocation0]]
  $region70: #{tpu_custom_call.1} parent=0
    _
  %s13 = ssub.s32 1, %s11
  %s14 = scalar_select 0, %s13, %s11
  $region1: #{tpu_custom_call.1} parent=0
    #allocation2 [shape = 'u8[2048]{0}', space=vmem, size = 0x800, scoped, tag = 'input window, operand 0, single buffered']
    #allocation3 [shape = 's32[1]{0}', space=sflag, size = 0x4, scoped, tag = 'scoped memory for tpu_custom_call.1']
    #allocation4 [shape = 's32[1]{0}', space=sflag, size = 0x4, scoped, tag = 'scoped memory for tpu_custom_call.1']
    #allocation5 [shape = 'u8[4096]{0}', space=vmem, size = 0x1000, scoped, tag = 'input window, operand 1, single buffered']
    #allocation6 [shape = 's32[1]{0}', space=sflag, size = 0x4, scoped, tag = 'scoped memory for tpu_custom_call.1']
    #allocation7 [shape = 'u8[8192]{0}', space=vmem, size = 0x2000, scoped, tag = 'input window, operand 2, single buffered']
    #allocation8 [shape = 'u8[32768]{0}', space=vmem, size = 0x8000, scoped, tag = 'input window, operand 4, single buffered']
    #allocation9 [shape = 's32[1]{0}', space=sflag, size = 0x4, scoped, tag = 'scoped memory for tpu_custom_call.1']
    #allocation10 [shape = 'u8[32768]{0}', space=vmem, size = 0x8000, scoped, tag = 'input window, operand 6, single buffered']
    #allocation11 [shape = 'u8[2048]{0}', space=vmem, size = 0x800, scoped, tag = 'output window, operand 0, single buffered']
    %15 = vsyncpa [#allocation3], 0
    %16 = vsyncpa [#allocation6], 0
    %17 = vsyncpa [#allocation9], 0
    %18 = vsyncpa [#allocation4], 0
    // Predicated region
    $region2: #{tpu_custom_call.1} parent=1 // pred_check
      _
    $region3: #{tpu_custom_call.1} parent=1 // pred_check_branch
      %20 = sbr.rel (0) target = $region5
    $region4: #{tpu_custom_call.1} parent=1 // pred_region
      %s22 = ssub.s32 64, 64
      %23 = vsyncadd [#allocation3], %s22
      %s25 = sshll.u32 [#allocation2], 4
      %s26 = int_to_ptr.vmem [resolvable:$true] %s25
      %28 = dma.hbm_to_vmem [thread:$0]  %s0, 64, %s26, [#allocation3]
    $region5: #{tpu_custom_call.1} parent=1 // pred_fallthru
      _
    // Predicated region
    $region6: #{tpu_custom_call.1} parent=1 // pred_check
      _
    $region7: #{tpu_custom_call.1} parent=1 // pred_check_branch
      %30 = sbr.rel (0) target = $region9
    $region8: #{tpu_custom_call.1} parent=1 // pred_region
      %s32 = ssub.s32 128, 128
      %33 = vsyncadd [#allocation6], %s32
      %s35 = sshll.u32 [#allocation5], 4
      %s36 = int_to_ptr.vmem [resolvable:$true] %s35
      %38 = dma.hbm_to_vmem [thread:$0]  %s1, 128, %s36, [#allocation6]
    $region9: #{tpu_custom_call.1} parent=1 // pred_fallthru
      _
    // Predicated region
    $region10: #{tpu_custom_call.1} parent=1 // pred_check
      _
    $region11: #{tpu_custom_call.1} parent=1 // pred_check_branch
      %40 = sbr.rel (0) target = $region13
    $region12: #{tpu_custom_call.1} parent=1 // pred_region
      %s42 = ssub.s32 256, 256
      %43 = vsyncadd [#allocation6], %s42
      %s44 = sshll.u32 [#allocation7], 4
      %s45 = int_to_ptr.vmem [resolvable:$true] %s44
      %50 = dma.hbm_to_vmem [thread:$0]  %s2, 256, %s45, [#allocation6], 64, 64, 4
    $region13: #{tpu_custom_call.1} parent=1 // pred_fallthru
      _
    // Predicated region
    $region14: #{tpu_custom_call.1} parent=1 // pred_check
      _
    $region15: #{tpu_custom_call.1} parent=1 // pred_check_branch
      %52 = sbr.rel (0) target = $region17
    $region16: #{tpu_custom_call.1} parent=1 // pred_region
      _
    $region17: #{tpu_custom_call.1} parent=1 // pred_fallthru
      _
    // Predicated region
    $region18: #{tpu_custom_call.1} parent=1 // pred_check
      _
    $region19: #{tpu_custom_call.1} parent=1 // pred_check_branch
      %54 = sbr.rel (0) target = $region21
    $region20: #{tpu_custom_call.1} parent=1 // pred_region
      %s56 = ssub.s32 1024, 1024
      %57 = vsyncadd [#allocation9], %s56
      %s58 = sshll.u32 [#allocation8], 4
      %s59 = int_to_ptr.vmem [resolvable:$true] %s58
      %64 = dma.hbm_to_vmem [thread:$0]  %s4, 1024, %s59, [#allocation9], 64, 64, 4
    $region21: #{tpu_custom_call.1} parent=1 // pred_fallthru
      _
    // Predicated region
    $region22: #{tpu_custom_call.1} parent=1 // pred_check
      _
    $region23: #{tpu_custom_call.1} parent=1 // pred_check_branch
      %66 = sbr.rel (0) target = $region25
    $region24: #{tpu_custom_call.1} parent=1 // pred_region
      _
    $region25: #{tpu_custom_call.1} parent=1 // pred_fallthru
      _
    // Predicated region
    $region26: #{tpu_custom_call.1} parent=1 // pred_check
      _
    $region27: #{tpu_custom_call.1} parent=1 // pred_check_branch
      %68 = sbr.rel (0) target = $region29
    $region28: #{tpu_custom_call.1} parent=1 // pred_region
      %s70 = ssub.s32 1024, 1024
      %71 = vsyncadd [#allocation9], %s70
      %s72 = sshll.u32 [#allocation10], 4
      %s73 = int_to_ptr.vmem [resolvable:$true] %s72
      %78 = dma.hbm_to_vmem [thread:$0]  %s6, 1024, %s73, [#allocation9], 64, 64, 4
    $region29: #{tpu_custom_call.1} parent=1 // pred_fallthru
      _
    // Predicated region
    $region30: #{tpu_custom_call.1} parent=1 // pred_check
      _
    $region31: #{tpu_custom_call.1} parent=1 // pred_check_branch
      %80 = sbr.rel (0) target = $region33
    $region32: #{tpu_custom_call.1} parent=1 // pred_region
      _
    $region33: #{tpu_custom_call.1} parent=1 // pred_fallthru
      _
    // Predicated region
    $region34: #{tpu_custom_call.1} parent=1 // pred_check
      _
    $region35: #{tpu_custom_call.1} parent=1 // pred_check_branch
      %82 = sbr.rel (0) target = $region37
    $region36: #{tpu_custom_call.1} parent=1 // pred_region
      %83 = dma.done [#allocation3], 64
    $region37: #{tpu_custom_call.1} parent=1 // pred_fallthru
      _
    // Predicated region
    $region38: #{tpu_custom_call.1} parent=1 // pred_check
      _
    $region39: #{tpu_custom_call.1} parent=1 // pred_check_branch
      %85 = sbr.rel (0) target = $region41
    $region40: #{tpu_custom_call.1} parent=1 // pred_region
      %86 = dma.done [#allocation6], 128
    $region41: #{tpu_custom_call.1} parent=1 // pred_fallthru
      _
    // Predicated region
    $region42: #{tpu_custom_call.1} parent=1 // pred_check
      _
    $region43: #{tpu_custom_call.1} parent=1 // pred_check_branch
      %88 = sbr.rel (0) target = $region45
    $region44: #{tpu_custom_call.1} parent=1 // pred_region
      %89 = dma.done [#allocation6], 256
    $region45: #{tpu_custom_call.1} parent=1 // pred_fallthru
      _
    // Predicated region
    $region46: #{tpu_custom_call.1} parent=1 // pred_check
      _
    $region47: #{tpu_custom_call.1} parent=1 // pred_check_branch
      %91 = sbr.rel (0) target = $region49
    $region48: #{tpu_custom_call.1} parent=1 // pred_region
      %92 = dma.done [#allocation9], 1024
    $region49: #{tpu_custom_call.1} parent=1 // pred_fallthru
      _
    // Predicated region
    $region50: #{tpu_custom_call.1} parent=1 // pred_check
      _
    $region51: #{tpu_custom_call.1} parent=1 // pred_check_branch
      %94 = sbr.rel (0) target = $region53
    $region52: #{tpu_custom_call.1} parent=1 // pred_region
      %95 = dma.done [#allocation9], 1024
    $region53: #{tpu_custom_call.1} parent=1 // pred_fallthru
      _
    %v97 = vld [vmem:[#allocation2] sm:$0xf]
    %v98 = vld [vmem:[#allocation7] sm:$0xf]
    %v99 = vld [vmem:[#allocation7 + $0x4] sm:$0xf]
    %v100 = vld [vmem:[#allocation7 + $0x8] sm:$0xf]
    %v101 = vld [vmem:[#allocation7 + $0xc] sm:$0xf]
    %v102 = vld [vmem:[%s3] sm:$0x1]
    %v104 = vlaneseq
    %v105 = vshrl.u32 %v104, 7
    %v106 = vsub.s32 0, %v105
    %v107 = vrot.slane %v102, %v106
    %v113 = vunpack.c.l.b16 %v98
    %v114 = vunpack.c.l.b16 %v99
    %v115 = vunpack.c.l.b16 %v100
    %v116 = vunpack.c.l.b16 %v101
    %v117 = vpack.c.b16 %v114, %v113
    %v118 = vpack.c.b16 %v116, %v115
    %vm121 = vcmask 261120
    %v123 = vsel %vm121, %v97, 0
    %125 = vmatprep.subr.bf16.mxu0 0
    %126 = vmatpush1.bf16.msra.mxu0 %v117
    %127 = vmatprep.subr.bf16.mxu0 0
    %128 = vmatpush1.bf16.msra.mxu0 %v118
    %129 = vmatprep.subr.bf16.mxu0 0
    %130 = vmatpush1.bf16.msra.mxu0 0
    %131 = vmatprep.subr.bf16.mxu0 0
    %132 = vmatpush1.bf16.msra.mxu0 0
    %133 = vmatprep.subr.bf16.mxu0 0
    %134 = vmatpush1.bf16.msra.mxu0 0
    %135 = vmatprep.subr.bf16.mxu0 0
    %136 = vmatpush1.bf16.msra.mxu0 0
    %137 = vmatprep.subr.bf16.mxu0 0
    %138 = vmatpush1.bf16.msra.mxu0 0
    %139 = vmatprep.subr.bf16.mxu0 0
    %140 = vmatpush1.bf16.msra.mxu0 0
    %141 = vmatprep.subr.bf16.mxu0 0
    %142 = vmatpush1.bf16.msra.mxu0 0
    %143 = vmatprep.subr.bf16.mxu0 0
    %144 = vmatpush1.bf16.msra.mxu0 0
    %145 = vmatprep.subr.bf16.mxu0 0
    %146 = vmatpush1.bf16.msra.mxu0 0
    %147 = vmatprep.subr.bf16.mxu0 0
    %148 = vmatpush1.bf16.msra.mxu0 0
    %149 = vmatprep.subr.bf16.mxu0 0
    %150 = vmatpush1.bf16.msra.mxu0 0
    %151 = vmatprep.subr.bf16.mxu0 0
    %152 = vmatpush1.bf16.msra.mxu0 0
    %153 = vmatprep.subr.bf16.mxu0 0
    %154 = vmatpush1.bf16.msra.mxu0 0
    %155 = vmatprep.subr.bf16.mxu0 0
    %156 = vmatpush1.bf16.msra.mxu0 0
    %157 = vmatprep.mubr.bf16.mxu0 0
    %158 = vmatmul.mubr.bf16.gmra.mrb[0].mxu0 %v123
    %v159 = vpop.f32.mrb[0].mxu0
    %v160 = vadd.f32 %v107, %v159
    %v161 = vpop.f32.mrb[0].mxu0
    %v162 = vpop.f32.mrb[0].mxu0
    %v163 = vpop.f32.mrb[0].mxu0
    %164 = vdwg.mxu0
    %vm165 = vcmp.gt.f32.partialorder %v160, 0.0
    %v166 = vmin.f32 %v160, 0.0
    %v167 = vmul.f32 %v166, 1.442695
    %v168 = vpow.pop %v167
    %v169 = vsub.f32 %v168, 1.0
    %v170 = vsel %vm165, %v160, %v169
    %v171 = vpack.c.bf16 %v170, %v170
    %v172 = vld [vmem:[#allocation8] sm:$0xf]
    %v173 = vld [vmem:[#allocation8 + $0x4] sm:$0xf]
    %v174 = vld [vmem:[#allocation8 + $0x8] sm:$0xf]
    %v175 = vld [vmem:[#allocation8 + $0xc] sm:$0xf]
    %v176 = vld [vmem:[#allocation8 + $0x10] sm:$0xf]
    %v177 = vld [vmem:[#allocation8 + $0x14] sm:$0xf]
    %v178 = vld [vmem:[#allocation8 + $0x18] sm:$0xf]
    %v179 = vld [vmem:[#allocation8 + $0x1c] sm:$0xf]
    %v180 = vld [vmem:[#allocation8 + $0x20] sm:$0xf]
    %v181 = vld [vmem:[#allocation8 + $0x24] sm:$0xf]
    %v182 = vld [vmem:[#allocation8 + $0x28] sm:$0xf]
    %v183 = vld [vmem:[#allocation8 + $0x2c] sm:$0xf]
    %v184 = vld [vmem:[#allocation8 + $0x30] sm:$0xf]
    %v185 = vld [vmem:[#allocation8 + $0x34] sm:$0xf]
    %v186 = vld [vmem:[#allocation8 + $0x38] sm:$0xf]
    %v187 = vld [vmem:[#allocation8 + $0x3c] sm:$0xf]
    %v188 = vld [vmem:[%s5] sm:$0x1]
    %v190 = vlaneseq
    %v191 = vshrl.u32 %v190, 7
    %v192 = vsub.s32 0, %v191
    %v193 = vrot.slane %v188, %v192
    %v211 = vunpack.c.l.b16 %v172
    %v212 = vunpack.c.l.b16 %v173
    %v213 = vunpack.c.l.b16 %v174
    %v214 = vunpack.c.l.b16 %v175
    %v215 = vunpack.c.l.b16 %v176
    %v216 = vunpack.c.l.b16 %v177
    %v217 = vunpack.c.l.b16 %v178
    %v218 = vunpack.c.l.b16 %v179
    %v219 = vunpack.c.l.b16 %v180
    %v220 = vunpack.c.l.b16 %v181
    %v221 = vunpack.c.l.b16 %v182
    %v222 = vunpack.c.l.b16 %v183
    %v223 = vunpack.c.l.b16 %v184
    %v224 = vunpack.c.l.b16 %v185
    %v225 = vunpack.c.l.b16 %v186
    %v226 = vunpack.c.l.b16 %v187
    %v227 = vpack.c.b16 %v212, %v211
    %v228 = vpack.c.b16 %v214, %v213
    %v229 = vpack.c.b16 %v216, %v215
    %v230 = vpack.c.b16 %v218, %v217
    %v231 = vpack.c.b16 %v220, %v219
    %v232 = vpack.c.b16 %v222, %v221
    %v233 = vpack.c.b16 %v224, %v223
    %v234 = vpack.c.b16 %v226, %v225
    %243 = vmatprep.subr.bf16.mxu0 0
    %244 = vmatpush1.bf16.msra.mxu0 %v227
    %245 = vmatprep.subr.bf16.mxu0 0
    %246 = vmatpush1.bf16.msra.mxu0 %v228
    %247 = vmatprep.subr.bf16.mxu0 0
    %248 = vmatpush1.bf16.msra.mxu0 %v229
    %249 = vmatprep.subr.bf16.mxu0 0
    %250 = vmatpush1.bf16.msra.mxu0 %v230
    %251 = vmatprep.subr.bf16.mxu0 0
    %252 = vmatpush1.bf16.msra.mxu0 %v231
    %253 = vmatprep.subr.bf16.mxu0 0
    %254 = vmatpush1.bf16.msra.mxu0 %v232
    %255 = vmatprep.subr.bf16.mxu0 0
    %256 = vmatpush1.bf16.msra.mxu0 %v233
    %257 = vmatprep.subr.bf16.mxu0 0
    %258 = vmatpush1.bf16.msra.mxu0 %v234
    %259 = vmatprep.subr.bf16.mxu0 0
    %260 = vmatpush1.bf16.msra.mxu0 0
    %261 = vmatprep.subr.bf16.mxu0 0
    %262 = vmatpush1.bf16.msra.mxu0 0
    %263 = vmatprep.subr.bf16.mxu0 0
    %264 = vmatpush1.bf16.msra.mxu0 0
    %265 = vmatprep.subr.bf16.mxu0 0
    %266 = vmatpush1.bf16.msra.mxu0 0
    %267 = vmatprep.subr.bf16.mxu0 0
    %268 = vmatpush1.bf16.msra.mxu0 0
    %269 = vmatprep.subr.bf16.mxu0 0
    %270 = vmatpush1.bf16.msra.mxu0 0
    %271 = vmatprep.subr.bf16.mxu0 0
    %272 = vmatpush1.bf16.msra.mxu0 0
    %273 = vmatprep.subr.bf16.mxu0 0
    %274 = vmatpush1.bf16.msra.mxu0 0
    %275 = vmatprep.mubr.bf16.mxu0 0
    %276 = vmatmul.mubr.bf16.gmra.mrb[0].mxu0 %v171
    %v277 = vpop.f32.mrb[0].mxu0
    %v278 = vadd.f32 %v193, %v277
    %v279 = vpop.f32.mrb[0].mxu0
    %v280 = vpop.f32.mrb[0].mxu0
    %v281 = vpop.f32.mrb[0].mxu0
    %282 = vdwg.mxu0
    %vm283 = vcmp.gt.f32.partialorder %v278, 0.0
    %v284 = vmin.f32 %v278, 0.0
    %v285 = vmul.f32 %v284, 1.442695
    %v286 = vpow.pop %v285
    %v287 = vsub.f32 %v286, 1.0
    %v288 = vsel %vm283, %v278, %v287
    %v289 = vpack.c.bf16 %v288, %v288
    %v290 = vld [vmem:[#allocation10] sm:$0xf]
    %v291 = vld [vmem:[#allocation10 + $0x4] sm:$0xf]
    %v292 = vld [vmem:[#allocation10 + $0x8] sm:$0xf]
    %v293 = vld [vmem:[#allocation10 + $0xc] sm:$0xf]
    %v294 = vld [vmem:[#allocation10 + $0x10] sm:$0xf]
    %v295 = vld [vmem:[#allocation10 + $0x14] sm:$0xf]
    %v296 = vld [vmem:[#allocation10 + $0x18] sm:$0xf]
    %v297 = vld [vmem:[#allocation10 + $0x1c] sm:$0xf]
    %v298 = vld [vmem:[#allocation10 + $0x20] sm:$0xf]
    %v299 = vld [vmem:[#allocation10 + $0x24] sm:$0xf]
    %v300 = vld [vmem:[#allocation10 + $0x28] sm:$0xf]
    %v301 = vld [vmem:[#allocation10 + $0x2c] sm:$0xf]
    %v302 = vld [vmem:[#allocation10 + $0x30] sm:$0xf]
    %v303 = vld [vmem:[#allocation10 + $0x34] sm:$0xf]
    %v304 = vld [vmem:[#allocation10 + $0x38] sm:$0xf]
    %v305 = vld [vmem:[#allocation10 + $0x3c] sm:$0xf]
    %v306 = vld [vmem:[%s7] sm:$0x1]
    %v308 = vlaneseq
    %v309 = vshrl.u32 %v308, 7
    %v310 = vsub.s32 0, %v309
    %v311 = vrot.slane %v306, %v310
    %v329 = vunpack.c.l.b16 %v290
    %v330 = vunpack.c.l.b16 %v291
    %v331 = vunpack.c.l.b16 %v292
    %v332 = vunpack.c.l.b16 %v293
    %v333 = vunpack.c.l.b16 %v294
    %v334 = vunpack.c.l.b16 %v295
    %v335 = vunpack.c.l.b16 %v296
    %v336 = vunpack.c.l.b16 %v297
    %v337 = vunpack.c.l.b16 %v298
    %v338 = vunpack.c.l.b16 %v299
    %v339 = vunpack.c.l.b16 %v300
    %v340 = vunpack.c.l.b16 %v301
    %v341 = vunpack.c.l.b16 %v302
    %v342 = vunpack.c.l.b16 %v303
    %v343 = vunpack.c.l.b16 %v304
    %v344 = vunpack.c.l.b16 %v305
    %v345 = vpack.c.b16 %v330, %v329
    %v346 = vpack.c.b16 %v332, %v331
    %v347 = vpack.c.b16 %v334, %v333
    %v348 = vpack.c.b16 %v336, %v335
    %v349 = vpack.c.b16 %v338, %v337
    %v350 = vpack.c.b16 %v340, %v339
    %v351 = vpack.c.b16 %v342, %v341
    %v352 = vpack.c.b16 %v344, %v343
    %361 = vmatprep.subr.bf16.mxu0 0
    %362 = vmatpush1.bf16.msra.mxu0 %v345
    %363 = vmatprep.subr.bf16.mxu0 0
    %364 = vmatpush1.bf16.msra.mxu0 %v346
    %365 = vmatprep.subr.bf16.mxu0 0
    %366 = vmatpush1.bf16.msra.mxu0 %v347
    %367 = vmatprep.subr.bf16.mxu0 0
    %368 = vmatpush1.bf16.msra.mxu0 %v348
    %369 = vmatprep.subr.bf16.mxu0 0
    %370 = vmatpush1.bf16.msra.mxu0 %v349
    %371 = vmatprep.subr.bf16.mxu0 0
    %372 = vmatpush1.bf16.msra.mxu0 %v350
    %373 = vmatprep.subr.bf16.mxu0 0
    %374 = vmatpush1.bf16.msra.mxu0 %v351
    %375 = vmatprep.subr.bf16.mxu0 0
    %376 = vmatpush1.bf16.msra.mxu0 %v352
    %377 = vmatprep.subr.bf16.mxu0 0
    %378 = vmatpush1.bf16.msra.mxu0 0
    %379 = vmatprep.subr.bf16.mxu0 0
    %380 = vmatpush1.bf16.msra.mxu0 0
    %381 = vmatprep.subr.bf16.mxu0 0
    %382 = vmatpush1.bf16.msra.mxu0 0
    %383 = vmatprep.subr.bf16.mxu0 0
    %384 = vmatpush1.bf16.msra.mxu0 0
    %385 = vmatprep.subr.bf16.mxu0 0
    %386 = vmatpush1.bf16.msra.mxu0 0
    %387 = vmatprep.subr.bf16.mxu0 0
    %388 = vmatpush1.bf16.msra.mxu0 0
    %389 = vmatprep.subr.bf16.mxu0 0
    %390 = vmatpush1.bf16.msra.mxu0 0
    %391 = vmatprep.subr.bf16.mxu0 0
    %392 = vmatpush1.bf16.msra.mxu0 0
    %393 = vmatprep.mubr.bf16.mxu0 0
    %394 = vmatmul.mubr.bf16.gmra.mrb[0].mxu0 %v289
    %v395 = vpop.f32.mrb[0].mxu0
    %v396 = vadd.f32 %v311, %v395
    %v397 = vpop.f32.mrb[0].mxu0
    %v398 = vpop.f32.mrb[0].mxu0
    %v399 = vpop.f32.mrb[0].mxu0
    %400 = vdwg.mxu0
    %401 = vmax.xlane.f32.xlu0 %v396
    %v402 = vpop.xlane.xlu0 %401
    %v403 = vsub.f32 %v396, %v402
    %v404 = vmul.f32 %v403, 1.442695
    %v405 = vpow.pop %v404
    %406 = vadd.xlane.f32.xlu0 %v405
    %v407 = vpop.xlane.xlu0 %406
    %v408 = vrcp.pop %v407
    %v409 = vmul.f32 %v405, %v408
    %v410 = vpack.c.bf16 %v409, %v409
    %411 = vst [vmem:[#allocation11] sm:$0xf] %v410
    %v412 = vlog2.pop %v407
    %v413 = vmul.f32 %v412, 0.6931472
    %v414 = vsub.f32 %v403, %v413
    %v415 = vld [vmem:[#allocation5] sm:$0xff]
    %v416 = vmul.f32 %v415, %v414
    %vm417 = vcmask 64512
    %v418 = vsel %vm417, %v416, 0.0
    %419 = vadd.xlane.f32.xlu0 %v418
    %v420 = vpop.xlane.xlu0 %419
    %vm421 = vcmask 7168
    %422 = vst.msk [vmem:[%s9] sm:$0xff] %vm421, %v420
    // Predicated region
    $region54: #{tpu_custom_call.1} parent=1 // pred_check
      _
    $region55: #{tpu_custom_call.1} parent=1 // pred_check_branch
      %424 = sbr.rel (0) target = $region57
    $region56: #{tpu_custom_call.1} parent=1 // pred_region
      %s426 = ssub.s32 64, 64
      %427 = vsyncadd [#allocation4], %s426
      %s429 = sshll.u32 [#allocation11], 4
      %s430 = int_to_ptr.vmem [resolvable:$true] %s429
      %432 = dma.vmem_to_hbm [thread:$0]  %s430, 64, %s8, [#allocation4]
    $region57: #{tpu_custom_call.1} parent=1 // pred_fallthru
      _
    // Predicated region
    $region58: #{tpu_custom_call.1} parent=1 // pred_check
      _
    $region59: #{tpu_custom_call.1} parent=1 // pred_check_branch
      %434 = sbr.rel (0) target = $region61
    $region60: #{tpu_custom_call.1} parent=1 // pred_region
      _
    $region61: #{tpu_custom_call.1} parent=1 // pred_fallthru
      _
    // Predicated region
    $region62: #{tpu_custom_call.1} parent=1 // pred_check
      _
    $region63: #{tpu_custom_call.1} parent=1 // pred_check_branch
      %436 = sbr.rel (0) target = $region65
    $region64: #{tpu_custom_call.1} parent=1 // pred_region
      %437 = dma.done [#allocation4], 64
    $region65: #{tpu_custom_call.1} parent=1 // pred_fallthru
      _
    // Predicated region
    $region66: #{tpu_custom_call.1} parent=1 // pred_check
      _
    $region67: #{tpu_custom_call.1} parent=1 // pred_check_branch
      %439 = sbr.rel (0) target = $region69
    $region68: #{tpu_custom_call.1} parent=1 // pred_region
      _
    $region69: #{tpu_custom_call.1} parent=1 // pred_fallthru
      _
    %440 = vsyncpa [#allocation3], 1
    %441 = vsyncpa [#allocation6], 1
    %442 = vsyncpa [#allocation9], 1
    %443 = vsyncpa [#allocation4], 1

</llo_original>
